<compile_context>
chip_gen: v7x
topology: tpu7x:2x2x1
jax: 0.10.0
libtpu: 0.0.40
codegen_flags: <defaults>
</compile_context>

<pallas_src>
import functools

import numpy as np
import jax
import jax.numpy as jnp
from jax.experimental import pallas as pl
from jax.experimental.pallas import tpu as pltpu


def _unpool_kernel(x_ref, w_ref, e_ref, sel_ref, o_ref):
    # x_ref:   (bm, rW)  bm flattened (n, c, row-group) rows of input pixels
    # w_ref:   (M, s2)   full per-row flattened-weight table (constant block)
    # e_ref:   (rW, P)   0/1 lane-placement matrix (exactly one 1 per column)
    # sel_ref: (s2, P)   0/1 weight-pattern selection (exactly one 1 per column)
    # o_ref:   (bm, P)   lane-dense output rows
    bm = x_ref.shape[0]
    m0 = pl.multiple_of(pl.program_id(0) * bm, bm)

    # Zero-insert upsample as a pure copy on the MXU.
    xr = jnp.dot(x_ref[...], e_ref[...], preferred_element_type=jnp.float32)

    # Per-row weight pattern over the P output lanes, also on the MXU (K = s*s).
    wrows = w_ref[pl.ds(m0, bm), :]
    wpat = jnp.dot(wrows, sel_ref[...], preferred_element_type=jnp.float32)

    o_ref[...] = (xr * wpat).astype(o_ref.dtype)


@functools.lru_cache(maxsize=None)
def _placement_constants(W, r, s, dtype_name):
    """Host (numpy) 0/1 constants mapping packed output lanes to their sources."""
    s2 = s * s
    rW = r * W
    P = r * s2 * W
    p = np.arange(P)
    t = p // (W * s)              # output sub-row within the row group
    q = p % (W * s)               # output column
    u = (t // s) * W + q // s     # source flat index within the (r, W) group
    k = (t % s) * s + (q % s)     # flattened (a, b) kernel index
    e_mat = (np.arange(rW)[:, None] == u[None, :]).astype(dtype_name)
    sel = (np.arange(s2)[:, None] == k[None, :]).astype(dtype_name)
    return e_mat, sel


def unpool(x, weights, stride=2):
    """x: (N, C, H, W); weights: (C, 1, stride, stride) -> (N, C, H*s, W*s)."""
    N, C, H, W = x.shape
    s = int(stride)
    # kernel_size == stride => non-overlapping placements (required here).
    assert weights.shape == (C, 1, s, s), "Unpool requires kernel_size == stride"
    s2 = s * s
    NC = N * C
    itemsize = jnp.dtype(x.dtype).itemsize

    # Pack r input rows per flattened row so P = r*s*s*W is a multiple of 128
    # (lane-dense, unmasked stores) whenever possible; keep r minimal so the
    # placement-matmul contraction K = r*W stays small.
    r = 1
    for d in range(1, H + 1):
        if H % d == 0 and (d * W * s2) % 128 == 0:
            r = d
            break
    G = H // r
    rW = r * W
    P = r * s2 * W
    M = NC * G

    # Block rows: ~8 MiB of output per grid step (HBM-bound), but keep >= 4
    # grid steps when possible (>= 2 per v7x TensorCore; pipelining on 1-TC
    # v5e/v6e).  bm must divide M and be a multiple of 8 (sublane-aligned).
    rows_cap = max(1, (8 * 1024 * 1024) // (P * itemsize))
    rows_cap = min(rows_cap, max(1, M // 4))
    cand = [d for d in range(1, min(M, rows_cap) + 1)
            if M % d == 0 and d % 8 == 0]
    bm = max(cand) if cand else M      # fallback: one full block (always legal)
    grid = (M // bm,)

    # Free, contiguous reshapes (no data movement).
    x2 = x.reshape(M, rW)
    # Per-row flattened weights: row m = (n*C + c)*G + g -> weights[c].
    w_nc = jnp.tile(weights.reshape(C, s2), (N, 1))          # (NC, s2)
    w_rows = jnp.repeat(w_nc, G, axis=0)                     # (M,  s2)

    e_np, sel_np = _placement_constants(W, r, s, jnp.dtype(x.dtype).name)
    e_mat = jnp.asarray(e_np)
    sel = jnp.asarray(sel_np)

    # Explicit VMEM budget: double-buffered blocks + constants + f32 temps.
    vmem_est = (2 * itemsize * (bm * rW + bm * P + rW * P + s2 * P + M * s2)
                + 8 * bm * P)
    vmem_limit = int(min(max(2 * vmem_est, 32 * 1024 * 1024),
                         64 * 1024 * 1024))

    cost = pl.CostEstimate(
        flops=2 * M * P * (rW + s2) + M * P,
        transcendentals=0,
        bytes_accessed=itemsize * (M * rW + M * s2 + rW * P + s2 * P + M * P))

    out = pl.pallas_call(
        _unpool_kernel,
        out_shape=jax.ShapeDtypeStruct((M, P), x.dtype),
        grid=grid,
        in_specs=[
            pl.BlockSpec((bm, rW), lambda i: (i, 0)),
            pl.BlockSpec((M, s2), lambda i: (0, 0)),    # constant index: 1 DMA
            pl.BlockSpec((rW, P), lambda i: (0, 0)),    # constant index: 1 DMA
            pl.BlockSpec((s2, P), lambda i: (0, 0)),    # constant index: 1 DMA
        ],
        out_specs=pl.BlockSpec((bm, P), lambda i: (i, 0)),
        compiler_params=pltpu.CompilerParams(
            dimension_semantics=("parallel",),
            vmem_limit_bytes=vmem_limit),
        cost_estimate=cost,
    )(x2, w_rows, e_mat, sel)

    # Contiguous reshape: (M, P) flat order == (N, C, H*s, W*s) flat order.
    return out.reshape(N, C, H * s, W * s)


if __name__ == "__main__":
    N, C, H, W = 2, 4, 16, 16
    stride = 2

    key = jax.random.PRNGKey(0)
    kx, kw = jax.random.split(key)
    x = jax.random.normal(kx, (N, C, H, W), dtype=jnp.float32)

    # Module init: zeros(C, 1, s, s) with [:, :, 0, 0] = 1 (delta kernel).
    weights = jnp.zeros((C, 1, stride, stride), dtype=jnp.float32)
    weights = weights.at[:, :, 0, 0].set(1.0)

    out = jax.block_until_ready(unpool(x, weights, stride=stride))

    # Reference 1: delta kernel == zero-insert upsampling (module semantics).
    ref = jnp.zeros((N, C, H * stride, W * stride), dtype=x.dtype)
    ref = ref.at[:, :, ::stride, ::stride].set(x)
    assert out.shape == ref.shape
    assert jnp.allclose(out, ref, atol=1e-6), "mismatch vs delta reference"

    # Reference 2: arbitrary per-channel (s, s) weights (generic grouped
    # transposed conv with kernel_size == stride).
    w_rand = jax.random.normal(kw, (C, 1, stride, stride), dtype=jnp.float32)
    out2 = jax.block_until_ready(unpool(x, w_rand, stride=stride))
    ref2 = jnp.einsum('nchw,cab->nchawb', x, w_rand[:, 0]).reshape(
        N, C, H * stride, W * stride)
    assert jnp.allclose(out2, ref2, rtol=1e-4, atol=1e-5), \
        "mismatch vs general reference"

    print("KERNEL_OK")
</pallas_src>

<mosaic_0001>
module attributes {stable_mosaic.version = 11 : i64} {
  func.func @_unpool_kernel(%arg0: i32, %arg1: memref<16x32xf32, #tpu.memory_space<vmem>>, %arg2: memref<64x4xf32, #tpu.memory_space<vmem>>, %arg3: memref<32x128xf32, #tpu.memory_space<vmem>>, %arg4: memref<4x128xf32, #tpu.memory_space<vmem>>, %arg5: memref<16x128xf32, #tpu.memory_space<vmem>>) attributes {dimension_semantics = [#tpu.dimension_semantics<parallel>], iteration_bounds = array<i64: 4>, scalar_prefetch = 0 : i64, scratch_operands = 0 : i64, tpu.core_type = #tpu.core_type<tc>, window_params = [{transform_indices = @transform_0, window_bounds = array<i64: 16, 32>}, {pipeline_mode = #tpu.pipeline_mode<synchronous>, transform_indices = @transform_1, window_bounds = array<i64: 64, 4>}, {pipeline_mode = #tpu.pipeline_mode<synchronous>, transform_indices = @transform_2, window_bounds = array<i64: 32, 128>}, {pipeline_mode = #tpu.pipeline_mode<synchronous>, transform_indices = @transform_3, window_bounds = array<i64: 4, 128>}, {transform_indices = @transform_4, window_bounds = array<i64: 16, 128>}]} {
    %c16_i32 = arith.constant 16 : i32
    %0 = arith.muli %arg0, %c16_i32 : i32
    %1 = tpu.assume_multiple %0, 16 : i32
    %c0 = arith.constant 0 : index
    %c0_0 = arith.constant 0 : index
    %2 = vector.load %arg1[%c0, %c0_0] : memref<16x32xf32, #tpu.memory_space<vmem>>, vector<16x32xf32>
    %c0_1 = arith.constant 0 : index
    %c0_2 = arith.constant 0 : index
    %3 = vector.load %arg3[%c0_1, %c0_2] : memref<32x128xf32, #tpu.memory_space<vmem>>, vector<32x128xf32>
    %cst = arith.constant dense<0.000000e+00> : vector<16x128xf32>
    %4 = tpu.matmul %2, %3, %cst {dimension_numbers = #tpu.dot_dimension_numbers<[1], [0], [0], [1], [0, 0, 1, 1], [], []>} : vector<16x32xf32>, vector<32x128xf32>, vector<16x128xf32> -> vector<16x128xf32>
    %5 = arith.index_cast %1 : i32 to index
    %c0_3 = arith.constant 0 : index
    %6 = vector.load %arg2[%5, %c0_3] : memref<64x4xf32, #tpu.memory_space<vmem>>, vector<16x4xf32>
    %c0_4 = arith.constant 0 : index
    %c0_5 = arith.constant 0 : index
    %7 = vector.load %arg4[%c0_4, %c0_5] : memref<4x128xf32, #tpu.memory_space<vmem>>, vector<4x128xf32>
    %cst_6 = arith.constant dense<0.000000e+00> : vector<16x128xf32>
    %8 = tpu.matmul %6, %7, %cst_6 {dimension_numbers = #tpu.dot_dimension_numbers<[1], [0], [0], [1], [0, 0, 1, 1], [], []>} : vector<16x4xf32>, vector<4x128xf32>, vector<16x128xf32> -> vector<16x128xf32>
    %9 = arith.mulf %4, %8 : vector<16x128xf32>
    %c0_7 = arith.constant 0 : index
    %c0_8 = arith.constant 0 : index
    %10 = vector.load %arg5[%c0_7, %c0_8] : memref<16x128xf32, #tpu.memory_space<vmem>>, vector<16x128xf32>
    tpu.vector_store %arg5[%c0_7, %c0_8], %9 {strides = array<i32>} : memref<16x128xf32, #tpu.memory_space<vmem>>, vector<16x128xf32>,
    return
  }
  func.func @transform_0(%arg0: i32) -> (i32, i32) {
    %c0_i32 = arith.constant 0 : i32
    %c0_i32_0 = arith.constant 0 : i32
    return %arg0, %c0_i32 : i32, i32
  }
  func.func @transform_1(%arg0: i32) -> (i32, i32) {
    %c0_i32 = arith.constant 0 : i32
    %c0_i32_0 = arith.constant 0 : i32
    %c0_i32_1 = arith.constant 0 : i32
    return %c0_i32, %c0_i32_0 : i32, i32
  }
  func.func @transform_2(%arg0: i32) -> (i32, i32) {
    %c0_i32 = arith.constant 0 : i32
    %c0_i32_0 = arith.constant 0 : i32
    %c0_i32_1 = arith.constant 0 : i32
    return %c0_i32, %c0_i32_0 : i32, i32
  }
  func.func @transform_3(%arg0: i32) -> (i32, i32) {
    %c0_i32 = arith.constant 0 : i32
    %c0_i32_0 = arith.constant 0 : i32
    %c0_i32_1 = arith.constant 0 : i32
    return %c0_i32, %c0_i32_0 : i32, i32
  }
  func.func @transform_4(%arg0: i32) -> (i32, i32) {
    %c0_i32 = arith.constant 0 : i32
    %c0_i32_0 = arith.constant 0 : i32
    return %arg0, %c0_i32 : i32, i32
  }
}

</mosaic_0001>

<llo_original>
// kernel: tpu_custom_call.1
$region0: #{tpu_custom_call.1}
  #allocation0 [shape = 'u32[]', space=smem, size = 0x4, offset = 0x4, fixed_abs, tag = 'smem constant byte address 0x4 - core index']
  #allocation1 [shape = 'u32[144,128]{1,0:T(1,128)}', space=vmem, size = 0x12000, scoped, tag = 'internal scratch']
  %s0 = inlined_call_operand.vmem [shape: f32[64,32], index: 0, kind: input, shape index: {}]
  %s1 = inlined_call_operand.vmem [shape: f32[64,4], index: 1, kind: input, shape index: {}]
  %s2 = inlined_call_operand.vmem [shape: f32[32,128], index: 2, kind: input, shape index: {}]
  %s3 = inlined_call_operand.vmem [shape: f32[4,128], index: 3, kind: input, shape index: {}]
  %s4 = inlined_call_operand.hbm [shape: f32[64,128], index: 4, kind: output, shape index: {}]
  %s5 = sld [smem:[#allocation0]]
  $region49: #{tpu_custom_call.1} parent=0
    _
  %s7 = ssub.s32 1, %s5
  %s8 = scalar_select 0, %s7, %s5
  $region1: #{tpu_custom_call.1} parent=0
    #allocation2 [shape = 'u8[16384]{0}', space=vmem, size = 0x4000, scoped, tag = 'output window, operand 0']
    #allocation3 [shape = 's32[2]{0}', space=sflag, size = 0x8, scoped, tag = 'scoped memory for tpu_custom_call.1']
    %9 = vsyncpa [#allocation3], 0
    %s10 = scalar_lea.sflag [#allocation3], 1
    %11 = vsyncpa %s10, 0
    loop: start=0, step=1, limit=6
    $region2: #{tpu_custom_call.1} parent=1 // loop_pre_header
      _
    $region3: #{tpu_custom_call.1} parent=1 // loop_header
      %s13 = sphi 0, %s17
      %p14 = scmp.ge.s32.totalorder %s13, 6
      %s23 = sphi 0, %s25
      %s26 = sphi 0, %s23
      %s27 = sphi 0, %s26
      %s43 = sphi 0, %s27
      %s47 = sphi 0, %s47
      %s49 = sphi 0, %s47
      %s50 = sphi 0, %s49
      %s64 = sphi 0, %s50
      %s68 = sphi 0, %s68
      %s70 = sphi 0, %s68
      %s71 = sphi 0, %s70
      %s85 = sphi 0, %s71
      %s89 = sphi 0, %s89
      %s91 = sphi 0, %s89
      %s92 = sphi 0, %s91
      %s106 = sphi 0, %s92
      %s112 = sphi 0, %s114
      %s115 = sphi 0, %s112
      %s116 = sphi 0, %s115
      %s132 = sphi 0, %s116
    $region4: #{tpu_custom_call.1} parent=1 // loop_header_branch
      %16 = sbr.rel (%p14) target = $region8
    $region5: #{tpu_custom_call.1} parent=1 // loop_body
      %s18 = ssub.s32 %s13, 1
      %s19 = ssub.s32 %s13, 2
      %s20 = sadd.s32 %s13, 1
      %s21 = ssub.s32 %s13, %s20
      %p22 = scmp.eq.s32.totalorder %s21, 0
      %s24 = sadd.s32 %s23, 1
      %s25 = scalar_select %p22, %s23, %s24
      %p28 = pneg %p22
      %p29 = scmp.eq.s32.totalorder %s13, 3
      %p30 = por %p28, %p29
      %p31 = scmp.ne.s32.totalorder %s23, %s26
      %p32 = scmp.eq.s32.totalorder %s13, 0
      %p33 = por %p31, %p32
      %p34 = scmp.ne.s32.totalorder %s23, %s26
      %p35 = scmp.eq.s32.totalorder %s18, 3
      %p36 = por %p34, %p35
      %p37 = scmp.ne.s32.totalorder %s26, %s27
      %p38 = scmp.eq.s32.totalorder %s18, 0
      %p39 = por %p37, %p38
      %p40 = scmp.ne.s32.totalorder %s26, %s27
      %p41 = scmp.eq.s32.totalorder %s19, 3
      %p42 = por %p40, %p41
      %p44 = scmp.ne.s32.totalorder %s27, %s43
      %p45 = scmp.eq.s32.totalorder %s19, 0
      %p46 = por %p44, %p45
      %s48 = sadd.s32 %s47, 1
      %p51 = scmp.eq.s32.totalorder %s13, 3
      %p52 = scmp.ne.s32.totalorder %s47, %s49
      %p53 = scmp.eq.s32.totalorder %s13, 0
      %p54 = por %p52, %p53
      %p55 = scmp.ne.s32.totalorder %s47, %s49
      %p56 = scmp.eq.s32.totalorder %s18, 3
      %p57 = por %p55, %p56
      %p58 = scmp.ne.s32.totalorder %s49, %s50
      %p59 = scmp.eq.s32.totalorder %s18, 0
      %p60 = por %p58, %p59
      %p61 = scmp.ne.s32.totalorder %s49, %s50
      %p62 = scmp.eq.s32.totalorder %s19, 3
      %p63 = por %p61, %p62
      %p65 = scmp.ne.s32.totalorder %s50, %s64
      %p66 = scmp.eq.s32.totalorder %s19, 0
      %p67 = por %p65, %p66
      %s69 = sadd.s32 %s68, 1
      %p72 = scmp.eq.s32.totalorder %s13, 3
      %p73 = scmp.ne.s32.totalorder %s68, %s70
      %p74 = scmp.eq.s32.totalorder %s13, 0
      %p75 = por %p73, %p74
      %p76 = scmp.ne.s32.totalorder %s68, %s70
      %p77 = scmp.eq.s32.totalorder %s18, 3
      %p78 = por %p76, %p77
      %p79 = scmp.ne.s32.totalorder %s70, %s71
      %p80 = scmp.eq.s32.totalorder %s18, 0
      %p81 = por %p79, %p80
      %p82 = scmp.ne.s32.totalorder %s70, %s71
      %p83 = scmp.eq.s32.totalorder %s19, 3
      %p84 = por %p82, %p83
      %p86 = scmp.ne.s32.totalorder %s71, %s85
      %p87 = scmp.eq.s32.totalorder %s19, 0
      %p88 = por %p86, %p87
      %s90 = sadd.s32 %s89, 1
      %p93 = scmp.eq.s32.totalorder %s13, 3
      %p94 = scmp.ne.s32.totalorder %s89, %s91
      %p95 = scmp.eq.s32.totalorder %s13, 0
      %p96 = por %p94, %p95
      %p97 = scmp.ne.s32.totalorder %s89, %s91
      %p98 = scmp.eq.s32.totalorder %s18, 3
      %p99 = por %p97, %p98
      %p100 = scmp.ne.s32.totalorder %s91, %s92
      %p101 = scmp.eq.s32.totalorder %s18, 0
      %p102 = por %p100, %p101
      %p103 = scmp.ne.s32.totalorder %s91, %s92
      %p104 = scmp.eq.s32.totalorder %s19, 3
      %p105 = por %p103, %p104
      %p107 = scmp.ne.s32.totalorder %s92, %s106
      %p108 = scmp.eq.s32.totalorder %s19, 0
      %p109 = por %p107, %p108
      %s110 = ssub.s32 %s13, %s20
      %p111 = scmp.eq.s32.totalorder %s110, 0
      %s113 = sadd.s32 %s112, 1
      %s114 = scalar_select %p111, %s112, %s113
      %p117 = pneg %p111
      %p118 = scmp.eq.s32.totalorder %s13, 3
      %p119 = por %p117, %p118
      %p120 = scmp.ne.s32.totalorder %s112, %s115
      %p121 = scmp.eq.s32.totalorder %s13, 0
      %p122 = por %p120, %p121
      %p123 = scmp.ne.s32.totalorder %s112, %s115
      %p124 = scmp.eq.s32.totalorder %s18, 3
      %p125 = por %p123, %p124
      %p126 = scmp.ne.s32.totalorder %s115, %s116
      %p127 = scmp.eq.s32.totalorder %s18, 0
      %p128 = por %p126, %p127
      %p129 = scmp.ne.s32.totalorder %s115, %s116
      %p130 = scmp.eq.s32.totalorder %s19, 3
      %p131 = por %p129, %p130
      %p133 = scmp.ne.s32.totalorder %s116, %s132
      %p134 = scmp.eq.s32.totalorder %s19, 0
      %p135 = por %p133, %p134
      %p136 = scmp.le.s32.totalorder 1, %s13
      %p137 = scmp.lt.s32.totalorder %s13, 5
      %p138 = pnand %p136, %p137
      %p139 = pneg %p138
      // Predicated region
      $region9: #{tpu_custom_call.1} parent=5 // pred_check
        _
      $region10: #{tpu_custom_call.1} parent=5 // pred_check_branch
        %141 = sbr.rel (%p138) target = $region12
      $region11: #{tpu_custom_call.1} parent=5 // pred_region
        %s142 = ssub.s32 %s13, 1
        // Predicated region
        $region13: #{tpu_custom_call.1} parent=11 // pred_check
          %p143 = pneg %p60
        $region14: #{tpu_custom_call.1} parent=11 // pred_check_branch
          %145 = sbr.rel (%p143) target = $region16
        $region15: #{tpu_custom_call.1} parent=11 // pred_region
          _
        $region16: #{tpu_custom_call.1} parent=11 // pred_fallthru
          _
        // Predicated region
        $region17: #{tpu_custom_call.1} parent=11 // pred_check
          %p146 = pneg %p81
        $region18: #{tpu_custom_call.1} parent=11 // pred_check_branch
          %148 = sbr.rel (%p146) target = $region20
        $region19: #{tpu_custom_call.1} parent=11 // pred_region
          _
        $region20: #{tpu_custom_call.1} parent=11 // pred_fallthru
          _
        // Predicated region
        $region21: #{tpu_custom_call.1} parent=11 // pred_check
          %p149 = pneg %p102
        $region22: #{tpu_custom_call.1} parent=11 // pred_check_branch
          %151 = sbr.rel (%p149) target = $region24
        $region23: #{tpu_custom_call.1} parent=11 // pred_region
          _
        $region24: #{tpu_custom_call.1} parent=11 // pred_fallthru
          _
      $region12: #{tpu_custom_call.1} parent=5 // pred_fallthru
        _
      %p152 = scmp.lt.s32.totalorder %s13, 4
      // Predicated region
      $region25: #{tpu_custom_call.1} parent=5 // pred_check
        %p153 = pneg %p152
      $region26: #{tpu_custom_call.1} parent=5 // pred_check_branch
        %155 = sbr.rel (%p153) target = $region28
      $region27: #{tpu_custom_call.1} parent=5 // pred_region
        // Predicated region
        $region29: #{tpu_custom_call.1} parent=27 // pred_check
          %p156 = pneg %p33
        $region30: #{tpu_custom_call.1} parent=27 // pred_check_branch
          %158 = sbr.rel (%p156) target = $region32
        $region31: #{tpu_custom_call.1} parent=27 // pred_region
          %s159 = smul.u32 2, %s13
          %p160 = scmp.lt.s32.totalorder %s159, 7
          %s161 = scalar_select %p160, %s159, 7
          %s162 = smul.addr %s161, 8
          %s163 = scalar_lea.vmem %s0, %s162
          %s164 = smul.u32 2, %s13
        $region32: #{tpu_custom_call.1} parent=27 // pred_fallthru
          _
      $region28: #{tpu_custom_call.1} parent=5 // pred_fallthru
        _
      %p165 = scmp.le.s32.totalorder 1, %s13
      %p166 = scmp.lt.s32.totalorder %s13, 5
      %p167 = pnand %p165, %p166
      %p168 = pneg %p167
      // Predicated region
      $region33: #{tpu_custom_call.1} parent=5 // pred_check
        _
      $region34: #{tpu_custom_call.1} parent=5 // pred_check_branch
        %170 = sbr.rel (%p167) target = $region36
      $region35: #{tpu_custom_call.1} parent=5 // pred_region
        %s171 = ssub.s32 %s13, 1
        %s172 = smul.u32 2, %s18
        %p173 = scmp.lt.s32.totalorder %s172, 7
        %s174 = scalar_select %p173, %s172, 7
        %s175 = smul.addr %s174, 8
        %s176 = scalar_lea.vmem %s0, %s175
        %p177 = pneg %p39
        %p178 = pneg %p36
        %p179 = pneg %p60
        %p180 = pneg %p57
        %p181 = pneg %p81
        %p182 = pneg %p78
        %p183 = pneg %p102
        %p184 = pneg %p99
        %p185 = pneg %p128
        %p186 = pneg %p125
        %s187 = sand.u32 %s115, 1
        %s188 = scalar_lea.sflag [#allocation3], %s187
        %s189 = sand.u32 %s115, 1
        %s190 = smul.addr %s189, 16
        %s191 = scalar_lea.vmem [#allocation2], %s190
        %s192 = smul.u32 2, %s18
        %p193 = scmp.lt.s32.totalorder %s192, 7
        %s194 = scalar_select %p193, %s192, 7
        %s195 = smul.addr %s194, 8
        %s196 = scalar_lea.vmem %s0, %s195
        %s197 = smul.u32 2, %s18
        %s198 = smul.u32 2, %s18
        %s199 = smul.u32 %s18, 16
        %v200 = vld [vmem:[%s196] sm:$0xff]
        %v201 = vld [vmem:[%s196 + $0x8] sm:$0xff]
        %v202 = vld [vmem:[%s2] sm:$0xff]
        %v203 = vld [vmem:[%s2 + $0x8] sm:$0xff]
        %v204 = vld [vmem:[%s2 + $0x10] sm:$0xff]
        %v205 = vld [vmem:[%s2 + $0x18] sm:$0xff]
        %vm206 = vcmask 261120
        %v208 = vsel %vm206, %v200, 0
        %v211 = vsel %vm206, %v201, 0
        %213 = vmatprep.subr.mxu0 0.0
        %214 = vmatpush1.msra.mxu0 %v202
        %215 = vmatprep.subr.mxu0 0.0
        %216 = vmatpush1.msra.mxu0 %v203
        %217 = vmatprep.subr.mxu0 0.0
        %218 = vmatpush1.msra.mxu0 %v204
        %219 = vmatprep.subr.mxu0 0.0
        %220 = vmatpush1.msra.mxu0 %v205
        %221 = vmatprep.subr.mxu0 0.0
        %222 = vmatpush1.msra.mxu0 0.0
        %223 = vmatprep.subr.mxu0 0.0
        %224 = vmatpush1.msra.mxu0 0.0
        %225 = vmatprep.subr.mxu0 0.0
        %226 = vmatpush1.msra.mxu0 0.0
        %227 = vmatprep.subr.mxu0 0.0
        %228 = vmatpush1.msra.mxu0 0.0
        %229 = vmatprep.subr.mxu0 0.0
        %230 = vmatpush1.msra.mxu0 0.0
        %231 = vmatprep.subr.mxu0 0.0
        %232 = vmatpush1.msra.mxu0 0.0
        %233 = vmatprep.subr.mxu0 0.0
        %234 = vmatpush1.msra.mxu0 0.0
        %235 = vmatprep.subr.mxu0 0.0
        %236 = vmatpush1.msra.mxu0 0.0
        %237 = vmatprep.subr.mxu0 0.0
        %238 = vmatpush1.msra.mxu0 0.0
        %239 = vmatprep.subr.mxu0 0.0
        %240 = vmatpush1.msra.mxu0 0.0
        %241 = vmatprep.subr.mxu0 0.0
        %242 = vmatpush1.msra.mxu0 0.0
        %243 = vmatprep.subr.mxu0 0.0
        %244 = vmatpush1.msra.mxu0 0.0
        %245 = vmatprep.subr.mxu0 0.0
        %246 = vmatpush1.msra.mxu0 0.0
        %247 = vmatprep.subr.mxu0 0.0
        %248 = vmatpush1.msra.mxu0 0.0
        %249 = vmatprep.subr.mxu0 0.0
        %250 = vmatpush1.msra.mxu0 0.0
        %251 = vmatprep.subr.mxu0 0.0
        %252 = vmatpush1.msra.mxu0 0.0
        %253 = vmatprep.subr.mxu0 0.0
        %254 = vmatpush1.msra.mxu0 0.0
        %255 = vmatprep.subr.mxu0 0.0
        %256 = vmatpush1.msra.mxu0 0.0
        %257 = vmatprep.subr.mxu0 0.0
        %258 = vmatpush1.msra.mxu0 0.0
        %259 = vmatprep.subr.mxu0 0.0
        %260 = vmatpush1.msra.mxu0 0.0
        %261 = vmatprep.subr.mxu0 0.0
        %262 = vmatpush1.msra.mxu0 0.0
        %263 = vmatprep.subr.mxu0 0.0
        %264 = vmatpush1.msra.mxu0 0.0
        %265 = vmatprep.subr.mxu0 0.0
        %266 = vmatpush1.msra.mxu0 0.0
        %267 = vmatprep.subr.mxu0 0.0
        %268 = vmatpush1.msra.mxu0 0.0
        %269 = vmatprep.subr.mxu0 0.0
        %270 = vmatpush1.msra.mxu0 0.0
        %271 = vmatprep.subr.mxu0 0.0
        %272 = vmatpush1.msra.mxu0 0.0
        %273 = vmatprep.subr.mxu0 0.0
        %274 = vmatpush1.msra.mxu0 0.0
        %275 = vmatprep.subr.mxu0 0.0
        %276 = vmatpush1.msra.mxu0 0.0
        %277 = vmatprep.mubr.f32.mxu0 0.0
        %278 = vmatmul.mubr.f32.gmra.mrb[0].mxu0 %v208
        %v279 = vpop.f32.mrb[0].mxu0
        %v280 = vadd.f32 0.0, %v279
        %v281 = vpop.f32.mrb[0].mxu0
        %282 = vmatprep.mubr.f32.mxu0 0.0
        %283 = vmatmul.mubr.f32.gmra.mrb[0].mxu0 %v211
        %v284 = vpop.f32.mrb[0].mxu0
        %v285 = vadd.f32 0.0, %v284
        %v286 = vpop.f32.mrb[0].mxu0
        %287 = vdwg.mxu0
        %s288 = scalar_lea.vmem %s1, %s199
        %v289 = vld [vmem:[%s288] sm:$0xff]
        %v290 = vld [vmem:[%s288 + $0x8] sm:$0xff]
        %v291 = vld [vmem:[%s3] sm:$0xf]
        %vm292 = vcmask 31744
        %v294 = vsel %vm292, %v289, 0
        %v297 = vsel %vm292, %v290, 0
        %vm299 = vcmask 1043456
        %v301 = vsel %vm299, %v291, 0
        %303 = vmatprep.subr.mxu0 0.0
        %304 = vmatpush1.msra.mxu0 %v301
        %305 = vmatprep.subr.mxu0 0.0
        %306 = vmatpush1.msra.mxu0 0.0
        %307 = vmatprep.subr.mxu0 0.0
        %308 = vmatpush1.msra.mxu0 0.0
        %309 = vmatprep.subr.mxu0 0.0
        %310 = vmatpush1.msra.mxu0 0.0
        %311 = vmatprep.subr.mxu0 0.0
        %312 = vmatpush1.msra.mxu0 0.0
        %313 = vmatprep.subr.mxu0 0.0
        %314 = vmatpush1.msra.mxu0 0.0
        %315 = vmatprep.subr.mxu0 0.0
        %316 = vmatpush1.msra.mxu0 0.0
        %317 = vmatprep.subr.mxu0 0.0
        %318 = vmatpush1.msra.mxu0 0.0
        %319 = vmatprep.subr.mxu0 0.0
        %320 = vmatpush1.msra.mxu0 0.0
        %321 = vmatprep.subr.mxu0 0.0
        %322 = vmatpush1.msra.mxu0 0.0
        %323 = vmatprep.subr.mxu0 0.0
        %324 = vmatpush1.msra.mxu0 0.0
        %325 = vmatprep.subr.mxu0 0.0
        %326 = vmatpush1.msra.mxu0 0.0
        %327 = vmatprep.subr.mxu0 0.0
        %328 = vmatpush1.msra.mxu0 0.0
        %329 = vmatprep.subr.mxu0 0.0
        %330 = vmatpush1.msra.mxu0 0.0
        %331 = vmatprep.subr.mxu0 0.0
        %332 = vmatpush1.msra.mxu0 0.0
        %333 = vmatprep.subr.mxu0 0.0
        %334 = vmatpush1.msra.mxu0 0.0
        %335 = vmatprep.subr.mxu0 0.0
        %336 = vmatpush1.msra.mxu0 0.0
        %337 = vmatprep.subr.mxu0 0.0
        %338 = vmatpush1.msra.mxu0 0.0
        %339 = vmatprep.subr.mxu0 0.0
        %340 = vmatpush1.msra.mxu0 0.0
        %341 = vmatprep.subr.mxu0 0.0
        %342 = vmatpush1.msra.mxu0 0.0
        %343 = vmatprep.subr.mxu0 0.0
        %344 = vmatpush1.msra.mxu0 0.0
        %345 = vmatprep.subr.mxu0 0.0
        %346 = vmatpush1.msra.mxu0 0.0
        %347 = vmatprep.subr.mxu0 0.0
        %348 = vmatpush1.msra.mxu0 0.0
        %349 = vmatprep.subr.mxu0 0.0
        %350 = vmatpush1.msra.mxu0 0.0
        %351 = vmatprep.subr.mxu0 0.0
        %352 = vmatpush1.msra.mxu0 0.0
        %353 = vmatprep.subr.mxu0 0.0
        %354 = vmatpush1.msra.mxu0 0.0
        %355 = vmatprep.subr.mxu0 0.0
        %356 = vmatpush1.msra.mxu0 0.0
        %357 = vmatprep.subr.mxu0 0.0
        %358 = vmatpush1.msra.mxu0 0.0
        %359 = vmatprep.subr.mxu0 0.0
        %360 = vmatpush1.msra.mxu0 0.0
        %361 = vmatprep.subr.mxu0 0.0
        %362 = vmatpush1.msra.mxu0 0.0
        %363 = vmatprep.subr.mxu0 0.0
        %364 = vmatpush1.msra.mxu0 0.0
        %365 = vmatprep.subr.mxu0 0.0
        %366 = vmatpush1.msra.mxu0 0.0
        %367 = vmatprep.mubr.f32.mxu0 0.0
        %368 = vmatmul.mubr.f32.gmra.mrb[0].mxu0 %v294
        %v369 = vpop.f32.mrb[0].mxu0
        %v370 = vadd.f32 0.0, %v369
        %v371 = vpop.f32.mrb[0].mxu0
        %372 = vmatprep.mubr.f32.mxu0 0.0
        %373 = vmatmul.mubr.f32.gmra.mrb[0].mxu0 %v297
        %v374 = vpop.f32.mrb[0].mxu0
        %v375 = vadd.f32 0.0, %v374
        %v376 = vpop.f32.mrb[0].mxu0
        %377 = vdwg.mxu0
        %v378 = vmul.f32 %v280, %v370
        %v379 = vmul.f32 %v285, %v375
        %380 = vst [vmem:[%s191] sm:$0xff] %v378
        %381 = vst [vmem:[%s191 + $0x8] sm:$0xff] %v379
        %s382 = sand.u32 %s115, 1
        %s383 = scalar_lea.sflag [#allocation3], %s382
        %s384 = sand.u32 %s115, 1
        %s385 = smul.addr %s384, 16
        %s386 = scalar_lea.vmem [#allocation2], %s385
        // Predicated region
        $region37: #{tpu_custom_call.1} parent=35 // pred_check
          %p387 = pneg %p125
        $region38: #{tpu_custom_call.1} parent=35 // pred_check_branch
          %389 = sbr.rel (%p387) target = $region40
        $region39: #{tpu_custom_call.1} parent=35 // pred_region
          %s390 = smul.u32 2, %s18
          %s392 = ssub.s32 256, 256
          %393 = vsyncadd %s383, %s392
          %s394 = smul.addr %s390, 128
          %s395 = scalar_lea.hbm %s4, %s394
          %s396 = sshll.u32 %s386, 4
          %s397 = int_to_ptr.vmem [resolvable:$true] %s396
          %402 = dma.vmem_to_hbm [thread:$0]  %s397, 256, %s395, %s383, 128, 128, 8
        $region40: #{tpu_custom_call.1} parent=35 // pred_fallthru
          _
      $region36: #{tpu_custom_call.1} parent=5 // pred_fallthru
        _
      %p403 = scmp.le.s32.totalorder 2, %s13
      // Predicated region
      $region41: #{tpu_custom_call.1} parent=5 // pred_check
        %p404 = pneg %p403
      $region42: #{tpu_custom_call.1} parent=5 // pred_check_branch
        %406 = sbr.rel (%p404) target = $region44
      $region43: #{tpu_custom_call.1} parent=5 // pred_region
        %s407 = ssub.s32 %s13, 2
        // Predicated region
        $region45: #{tpu_custom_call.1} parent=43 // pred_check
          %p408 = pneg %p131
        $region46: #{tpu_custom_call.1} parent=43 // pred_check_branch
          %410 = sbr.rel (%p408) target = $region48
        $region47: #{tpu_custom_call.1} parent=43 // pred_region
          %s411 = sand.u32 %s116, 1
          %s412 = scalar_lea.sflag [#allocation3], %s411
          %s413 = sand.u32 %s116, 1
          %s414 = smul.addr %s413, 16
          %s415 = scalar_lea.vmem [#allocation2], %s414
          %416 = dma.done %s412, 256
        $region48: #{tpu_custom_call.1} parent=43 // pred_fallthru
          _
      $region44: #{tpu_custom_call.1} parent=5 // pred_fallthru
        _
    $region6: #{tpu_custom_call.1} parent=1 // loop_footer
      %s17 = sadd.s32 1, %s13
    $region7: #{tpu_custom_call.1} parent=1 // loop_footer_branch
      %12 = sbr.rel target = $region3
    $region8: #{tpu_custom_call.1} parent=1 // loop_exit
      _
    %417 = vsyncpa [#allocation3], 1
    %s418 = scalar_lea.sflag [#allocation3], 1
    %419 = vsyncpa %s418, 1

</llo_original>
